<compile_context>
chip_gen: v7x
topology: tpu7x:2x2x1
jax: 0.10.0
libtpu: 0.0.40
codegen_flags: <defaults>
</compile_context>

<pallas_src>
import functools

import jax
import jax.numpy as jnp
from jax.experimental import pallas as pl
from jax.experimental.pallas import tpu as pltpu


def supernet_kernel(x_ref, wp_ref, out_ref, *, D_x, D_h, D_out):
    """Feature-major kernel: x_ref (D_x, TB), wp_ref packed weights, out_ref (D_out, TB)."""
    TB = x_ref.shape[-1]
    x = x_ref[...]                                               # (D_x, TB), batch on lanes

    def bias(row0, n_out, col):
        # (n_out, 1) bias column broadcast across the lane-dense batch tile.
        return jnp.broadcast_to(wp_ref[row0:row0 + n_out, col:col + 1], (n_out, TB))

    def fma(row0, n_out, col0, xin, acc):
        # acc[n, :] += sum_k wp[row0+n, col0+k] * xin[k, :]
        # Unrolled VPU broadcast-FMA (K <= 16): keeps these tiny matmuls off the MXU
        # round trip; each step is a (n_out,1) lane-broadcast x (1,TB) sublane-broadcast.
        for k in range(xin.shape[0]):
            w_col = wp_ref[row0:row0 + n_out, col0 + k:col0 + k + 1]   # (n_out, 1)
            acc = acc + w_col * xin[k:k + 1, :]                        # (1, TB)
        return acc

    # g(x) trunk: Linear -> ReLU -> Linear -> ReLU  (third Linear folded into output rows).
    h1 = jnp.maximum(fma(0, D_h, 0, x, bias(0, D_h, D_x)), 0.0)          # (D_h, TB)
    h2 = jnp.maximum(fma(D_h, D_h, 0, h1, bias(D_h, D_h, D_h)), 0.0)     # (D_h, TB)

    # Combined [x_tp1 ; eta_tp1] slab: one lane-dense (D_out, TB) store.
    r = 2 * D_h
    out = bias(r, D_out, D_x + D_h)          # c_out  (= [A_e; H_e] @ b3, folded)
    out = fma(r, D_out, 0, x, out)           # + W_out_x @ x
    out = fma(r, D_out, D_x, h2, out)        # + W_out_h @ h2  (= [A_e; H_e] @ W3 folded)
    out_ref[...] = out


def fold_params(params, D_x, D_h, D_e):
    """Fold W3/b3 and the A/H split into output rows and pack everything into ONE array.

    Packed layout (rows x cols = (2*D_h + D_out) x (D_x + D_h + 1)):
      rows [0, D_h)          : W1 (D_h, D_x) at cols [0, D_x),      b1 at col D_x
      rows [D_h, 2*D_h)      : W2 (D_h, D_h) at cols [0, D_h),      b2 at col D_h
      rows [2*D_h, +D_out)   : W_out_x at [0, D_x), W_out_h at [D_x, D_x+D_h), c_out at D_x+D_h
    """
    W1, b1, W2, b2, W3, b3, A_w, H_w = params
    D_out = D_x + D_e
    A_x, A_e = A_w[:, :D_x], A_w[:, D_x:]
    H_x, H_e = H_w[:, :D_x], H_w[:, D_x:]

    W_out_x = jnp.concatenate([A_x, H_x], axis=0)                       # (D_out, D_x)
    W_out_h = jnp.concatenate([A_e @ W3, H_e @ W3], axis=0)             # (D_out, D_h)
    c_out = jnp.concatenate([A_e @ b3[:, None], H_e @ b3[:, None]], 0)  # (D_out, 1)

    nrows, ncols = 2 * D_h + D_out, D_x + D_h + 1
    pack = jnp.zeros((nrows, ncols), jnp.float32)
    pack = pack.at[0:D_h, 0:D_x].set(W1)
    pack = pack.at[0:D_h, D_x:D_x + 1].set(b1[:, None])
    pack = pack.at[D_h:2 * D_h, 0:D_h].set(W2)
    pack = pack.at[D_h:2 * D_h, D_h:D_h + 1].set(b2[:, None])
    r = 2 * D_h
    pack = pack.at[r:r + D_out, 0:D_x].set(W_out_x)
    pack = pack.at[r:r + D_out, D_x:D_x + D_h].set(W_out_h)
    pack = pack.at[r:r + D_out, D_x + D_h:D_x + D_h + 1].set(c_out)
    return pack


def _pick_batch_tile(B):
    """Lane-aligned batch padding with >= 2 tiles so v7x's two TensorCores both get work."""
    LANE = 128
    B_pad = max(pl.cdiv(B, LANE) * LANE, 2 * LANE)
    TB = LANE
    for cand in (1024, 512, 256, 128):
        if B_pad % cand == 0 and B_pad // cand >= 2:
            TB = cand
            break
    return B_pad, TB


@functools.partial(jax.jit, static_argnames=("D_x", "D_h", "D_e"))
def supernet_forward(x, wpack, *, D_x, D_h, D_e):
    """x: (B, D_x) float32.  Returns (x_tp1 (B, D_x), eta_tp1 (B, D_e))."""
    B = x.shape[0]
    D_out = D_x + D_e
    B_pad, TB = _pick_batch_tile(B)
    grid = (B_pad // TB,)

    # Feature-major, lane-dense batch; padded rows are dropped after the call.
    x_t = jnp.zeros((D_x, B_pad), jnp.float32).at[:, :B].set(x.T)

    kernel = functools.partial(supernet_kernel, D_x=D_x, D_h=D_h, D_out=D_out)
    out_t = pl.pallas_call(
        kernel,
        out_shape=jax.ShapeDtypeStruct((D_out, B_pad), jnp.float32),
        grid=grid,
        in_specs=[
            pl.BlockSpec((D_x, TB), lambda i: (0, i)),        # batch tile on lanes
            pl.BlockSpec(wpack.shape, lambda i: (0, 0)),      # packed weights, VMEM-resident
        ],
        out_specs=pl.BlockSpec((D_out, TB), lambda i: (0, i)),
        compiler_params=pltpu.CompilerParams(
            dimension_semantics=("parallel",)),
    )(x_t, wpack)

    # Wrapper-side split/transpose back to batch-major (free XLA plumbing).
    return out_t[:D_x, :B].T, out_t[D_x:, :B].T


def init_params(key, D_x, D_h, D_e):
    """Deterministic synthetic parameters in PyTorch layout (weight = (out, in))."""
    D_xi = D_x + D_e
    ks = jax.random.split(key, 8)

    def lin_w(k, fan_out, fan_in):
        bound = 1.0 / jnp.sqrt(jnp.float32(fan_in))
        return jax.random.uniform(k, (fan_out, fan_in), jnp.float32, -bound, bound)

    def lin_b(k, fan_out, fan_in):
        bound = 1.0 / jnp.sqrt(jnp.float32(fan_in))
        return jax.random.uniform(k, (fan_out,), jnp.float32, -bound, bound)

    W1 = lin_w(ks[0], D_h, D_x); b1 = lin_b(ks[1], D_h, D_x)
    W2 = lin_w(ks[2], D_h, D_h); b2 = lin_b(ks[3], D_h, D_h)
    W3 = lin_w(ks[4], D_e, D_h); b3 = lin_b(ks[5], D_e, D_h)
    A_w = lin_w(ks[6], D_x, D_xi)       # Linear(D_xi, D_x, bias=False)
    H_w = lin_w(ks[7], D_e, D_xi)       # Linear(D_xi, D_e, bias=False)
    return (W1, b1, W2, b2, W3, b3, A_w, H_w)


def reference_forward(x, params):
    """Pure-JAX reference matching the PyTorch SuperNetwork.forward semantics."""
    W1, b1, W2, b2, W3, b3, A_w, H_w = params
    h1 = jnp.maximum(x @ W1.T + b1, 0.0)
    h2 = jnp.maximum(h1 @ W2.T + b2, 0.0)
    eta = h2 @ W3.T + b3
    xi = jnp.concatenate([x, eta], axis=1)
    return xi @ A_w.T, xi @ H_w.T


if __name__ == "__main__":
    # Small shapes consistent with the module: D_x=4 state dims, D_h=16 hidden, D_e=10 latent.
    B, D_x, D_h, D_e = 8, 4, 16, 10

    key = jax.random.PRNGKey(0)
    k_x, k_p = jax.random.split(key)
    x = jax.random.normal(k_x, (B, D_x), jnp.float32)
    params = init_params(k_p, D_x, D_h, D_e)
    wpack = fold_params(params, D_x, D_h, D_e)   # one-time preprocessing, outside the kernel

    x_tp1, eta_tp1 = supernet_forward(x, wpack, D_x=D_x, D_h=D_h, D_e=D_e)
    jax.block_until_ready((x_tp1, eta_tp1))

    x_ref, eta_ref = reference_forward(x, params)
    assert x_tp1.shape == (B, D_x) and eta_tp1.shape == (B, D_e)
    # Slightly looser tolerance: folding W3/b3 into the output rows changes accumulation order.
    assert jnp.allclose(x_tp1, x_ref, atol=1e-4, rtol=1e-4)
    assert jnp.allclose(eta_tp1, eta_ref, atol=1e-4, rtol=1e-4)

    print("KERNEL_OK")
</pallas_src>

<mosaic_0001>
module attributes {stable_mosaic.version = 11 : i64} {
  func.func @supernet_kernel(%arg0: i32, %arg1: memref<4x128xf32, #tpu.memory_space<vmem>>, %arg2: memref<46x21xf32, #tpu.memory_space<vmem>>, %arg3: memref<14x128xf32, #tpu.memory_space<vmem>>) attributes {dimension_semantics = [#tpu.dimension_semantics<parallel>], iteration_bounds = array<i64: 2>, scalar_prefetch = 0 : i64, scratch_operands = 0 : i64, tpu.core_type = #tpu.core_type<tc>, window_params = [{transform_indices = @transform_0, window_bounds = array<i64: 4, 128>}, {pipeline_mode = #tpu.pipeline_mode<synchronous>, transform_indices = @transform_1, window_bounds = array<i64: 46, 21>}, {transform_indices = @transform_2, window_bounds = array<i64: 14, 128>}]} {
    %c0 = arith.constant 0 : index
    %c0_0 = arith.constant 0 : index
    %0 = vector.load %arg1[%c0, %c0_0] : memref<4x128xf32, #tpu.memory_space<vmem>>, vector<4x128xf32>
    %c0_1 = arith.constant 0 : index
    %c4 = arith.constant 4 : index
    %1 = vector.load %arg2[%c0_1, %c4] : memref<46x21xf32, #tpu.memory_space<vmem>>, vector<16x1xf32>
    %2 = vector.shape_cast %1 : vector<16x1xf32> to vector<16x1xf32>
    %3 = vector.broadcast %2 : vector<16x1xf32> to vector<16x128xf32>
    %c0_2 = arith.constant 0 : index
    %c0_3 = arith.constant 0 : index
    %4 = vector.load %arg2[%c0_2, %c0_3] : memref<46x21xf32, #tpu.memory_space<vmem>>, vector<16x1xf32>
    %5 = vector.extract_strided_slice %0 {offsets = [0, 0], sizes = [1, 128], strides = [1, 1]} : vector<4x128xf32> to vector<1x128xf32>
    %6 = vector.broadcast %4 : vector<16x1xf32> to vector<16x128xf32>
    %7 = vector.broadcast %5 : vector<1x128xf32> to vector<16x128xf32>
    %8 = arith.mulf %6, %7 : vector<16x128xf32>
    %9 = arith.addf %3, %8 : vector<16x128xf32>
    %c0_4 = arith.constant 0 : index
    %c1 = arith.constant 1 : index
    %10 = vector.load %arg2[%c0_4, %c1] : memref<46x21xf32, #tpu.memory_space<vmem>>, vector<16x1xf32>
    %11 = vector.extract_strided_slice %0 {offsets = [1, 0], sizes = [1, 128], strides = [1, 1]} : vector<4x128xf32> to vector<1x128xf32>
    %12 = vector.broadcast %10 : vector<16x1xf32> to vector<16x128xf32>
    %13 = vector.broadcast %11 : vector<1x128xf32> to vector<16x128xf32>
    %14 = arith.mulf %12, %13 : vector<16x128xf32>
    %15 = arith.addf %9, %14 : vector<16x128xf32>
    %c0_5 = arith.constant 0 : index
    %c2 = arith.constant 2 : index
    %16 = vector.load %arg2[%c0_5, %c2] : memref<46x21xf32, #tpu.memory_space<vmem>>, vector<16x1xf32>
    %17 = vector.extract_strided_slice %0 {offsets = [2, 0], sizes = [1, 128], strides = [1, 1]} : vector<4x128xf32> to vector<1x128xf32>
    %18 = vector.broadcast %16 : vector<16x1xf32> to vector<16x128xf32>
    %19 = vector.broadcast %17 : vector<1x128xf32> to vector<16x128xf32>
    %20 = arith.mulf %18, %19 : vector<16x128xf32>
    %21 = arith.addf %15, %20 : vector<16x128xf32>
    %c0_6 = arith.constant 0 : index
    %c3 = arith.constant 3 : index
    %22 = vector.load %arg2[%c0_6, %c3] : memref<46x21xf32, #tpu.memory_space<vmem>>, vector<16x1xf32>
    %23 = vector.extract_strided_slice %0 {offsets = [3, 0], sizes = [1, 128], strides = [1, 1]} : vector<4x128xf32> to vector<1x128xf32>
    %24 = vector.broadcast %22 : vector<16x1xf32> to vector<16x128xf32>
    %25 = vector.broadcast %23 : vector<1x128xf32> to vector<16x128xf32>
    %26 = arith.mulf %24, %25 : vector<16x128xf32>
    %27 = arith.addf %21, %26 : vector<16x128xf32>
    %cst = arith.constant 0.000000e+00 : f32
    %28 = vector.broadcast %cst : f32 to vector<16x128xf32>
    %29 = arith.maximumf %27, %28 : vector<16x128xf32>
    %c16 = arith.constant 16 : index
    %c16_7 = arith.constant 16 : index
    %30 = vector.load %arg2[%c16, %c16_7] : memref<46x21xf32, #tpu.memory_space<vmem>>, vector<16x1xf32>
    %31 = vector.shape_cast %30 : vector<16x1xf32> to vector<16x1xf32>
    %32 = vector.broadcast %31 : vector<16x1xf32> to vector<16x128xf32>
    %c16_8 = arith.constant 16 : index
    %c0_9 = arith.constant 0 : index
    %33 = vector.load %arg2[%c16_8, %c0_9] : memref<46x21xf32, #tpu.memory_space<vmem>>, vector<16x1xf32>
    %34 = vector.extract_strided_slice %29 {offsets = [0, 0], sizes = [1, 128], strides = [1, 1]} : vector<16x128xf32> to vector<1x128xf32>
    %35 = vector.broadcast %33 : vector<16x1xf32> to vector<16x128xf32>
    %36 = vector.broadcast %34 : vector<1x128xf32> to vector<16x128xf32>
    %37 = arith.mulf %35, %36 : vector<16x128xf32>
    %38 = arith.addf %32, %37 : vector<16x128xf32>
    %c16_10 = arith.constant 16 : index
    %c1_11 = arith.constant 1 : index
    %39 = vector.load %arg2[%c16_10, %c1_11] : memref<46x21xf32, #tpu.memory_space<vmem>>, vector<16x1xf32>
    %40 = vector.extract_strided_slice %29 {offsets = [1, 0], sizes = [1, 128], strides = [1, 1]} : vector<16x128xf32> to vector<1x128xf32>
    %41 = vector.broadcast %39 : vector<16x1xf32> to vector<16x128xf32>
    %42 = vector.broadcast %40 : vector<1x128xf32> to vector<16x128xf32>
    %43 = arith.mulf %41, %42 : vector<16x128xf32>
    %44 = arith.addf %38, %43 : vector<16x128xf32>
    %c16_12 = arith.constant 16 : index
    %c2_13 = arith.constant 2 : index
    %45 = vector.load %arg2[%c16_12, %c2_13] : memref<46x21xf32, #tpu.memory_space<vmem>>, vector<16x1xf32>
    %46 = vector.extract_strided_slice %29 {offsets = [2, 0], sizes = [1, 128], strides = [1, 1]} : vector<16x128xf32> to vector<1x128xf32>
    %47 = vector.broadcast %45 : vector<16x1xf32> to vector<16x128xf32>
    %48 = vector.broadcast %46 : vector<1x128xf32> to vector<16x128xf32>
    %49 = arith.mulf %47, %48 : vector<16x128xf32>
    %50 = arith.addf %44, %49 : vector<16x128xf32>
    %c16_14 = arith.constant 16 : index
    %c3_15 = arith.constant 3 : index
    %51 = vector.load %arg2[%c16_14, %c3_15] : memref<46x21xf32, #tpu.memory_space<vmem>>, vector<16x1xf32>
    %52 = vector.extract_strided_slice %29 {offsets = [3, 0], sizes = [1, 128], strides = [1, 1]} : vector<16x128xf32> to vector<1x128xf32>
    %53 = vector.broadcast %51 : vector<16x1xf32> to vector<16x128xf32>
    %54 = vector.broadcast %52 : vector<1x128xf32> to vector<16x128xf32>
    %55 = arith.mulf %53, %54 : vector<16x128xf32>
    %56 = arith.addf %50, %55 : vector<16x128xf32>
    %c16_16 = arith.constant 16 : index
    %c4_17 = arith.constant 4 : index
    %57 = vector.load %arg2[%c16_16, %c4_17] : memref<46x21xf32, #tpu.memory_space<vmem>>, vector<16x1xf32>
    %58 = vector.extract_strided_slice %29 {offsets = [4, 0], sizes = [1, 128], strides = [1, 1]} : vector<16x128xf32> to vector<1x128xf32>
    %59 = vector.broadcast %57 : vector<16x1xf32> to vector<16x128xf32>
    %60 = vector.broadcast %58 : vector<1x128xf32> to vector<16x128xf32>
    %61 = arith.mulf %59, %60 : vector<16x128xf32>
    %62 = arith.addf %56, %61 : vector<16x128xf32>
    %c16_18 = arith.constant 16 : index
    %c5 = arith.constant 5 : index
    %63 = vector.load %arg2[%c16_18, %c5] : memref<46x21xf32, #tpu.memory_space<vmem>>, vector<16x1xf32>
    %64 = vector.extract_strided_slice %29 {offsets = [5, 0], sizes = [1, 128], strides = [1, 1]} : vector<16x128xf32> to vector<1x128xf32>
    %65 = vector.broadcast %63 : vector<16x1xf32> to vector<16x128xf32>
    %66 = vector.broadcast %64 : vector<1x128xf32> to vector<16x128xf32>
    %67 = arith.mulf %65, %66 : vector<16x128xf32>
    %68 = arith.addf %62, %67 : vector<16x128xf32>
    %c16_19 = arith.constant 16 : index
    %c6 = arith.constant 6 : index
    %69 = vector.load %arg2[%c16_19, %c6] : memref<46x21xf32, #tpu.memory_space<vmem>>, vector<16x1xf32>
    %70 = vector.extract_strided_slice %29 {offsets = [6, 0], sizes = [1, 128], strides = [1, 1]} : vector<16x128xf32> to vector<1x128xf32>
    %71 = vector.broadcast %69 : vector<16x1xf32> to vector<16x128xf32>
    %72 = vector.broadcast %70 : vector<1x128xf32> to vector<16x128xf32>
    %73 = arith.mulf %71, %72 : vector<16x128xf32>
    %74 = arith.addf %68, %73 : vector<16x128xf32>
    %c16_20 = arith.constant 16 : index
    %c7 = arith.constant 7 : index
    %75 = vector.load %arg2[%c16_20, %c7] : memref<46x21xf32, #tpu.memory_space<vmem>>, vector<16x1xf32>
    %76 = vector.extract_strided_slice %29 {offsets = [7, 0], sizes = [1, 128], strides = [1, 1]} : vector<16x128xf32> to vector<1x128xf32>
    %77 = vector.broadcast %75 : vector<16x1xf32> to vector<16x128xf32>
    %78 = vector.broadcast %76 : vector<1x128xf32> to vector<16x128xf32>
    %79 = arith.mulf %77, %78 : vector<16x128xf32>
    %80 = arith.addf %74, %79 : vector<16x128xf32>
    %c16_21 = arith.constant 16 : index
    %c8 = arith.constant 8 : index
    %81 = vector.load %arg2[%c16_21, %c8] : memref<46x21xf32, #tpu.memory_space<vmem>>, vector<16x1xf32>
    %82 = vector.extract_strided_slice %29 {offsets = [8, 0], sizes = [1, 128], strides = [1, 1]} : vector<16x128xf32> to vector<1x128xf32>
    %83 = vector.broadcast %81 : vector<16x1xf32> to vector<16x128xf32>
    %84 = vector.broadcast %82 : vector<1x128xf32> to vector<16x128xf32>
    %85 = arith.mulf %83, %84 : vector<16x128xf32>
    %86 = arith.addf %80, %85 : vector<16x128xf32>
    %c16_22 = arith.constant 16 : index
    %c9 = arith.constant 9 : index
    %87 = vector.load %arg2[%c16_22, %c9] : memref<46x21xf32, #tpu.memory_space<vmem>>, vector<16x1xf32>
    %88 = vector.extract_strided_slice %29 {offsets = [9, 0], sizes = [1, 128], strides = [1, 1]} : vector<16x128xf32> to vector<1x128xf32>
    %89 = vector.broadcast %87 : vector<16x1xf32> to vector<16x128xf32>
    %90 = vector.broadcast %88 : vector<1x128xf32> to vector<16x128xf32>
    %91 = arith.mulf %89, %90 : vector<16x128xf32>
    %92 = arith.addf %86, %91 : vector<16x128xf32>
    %c16_23 = arith.constant 16 : index
    %c10 = arith.constant 10 : index
    %93 = vector.load %arg2[%c16_23, %c10] : memref<46x21xf32, #tpu.memory_space<vmem>>, vector<16x1xf32>
    %94 = vector.extract_strided_slice %29 {offsets = [10, 0], sizes = [1, 128], strides = [1, 1]} : vector<16x128xf32> to vector<1x128xf32>
    %95 = vector.broadcast %93 : vector<16x1xf32> to vector<16x128xf32>
    %96 = vector.broadcast %94 : vector<1x128xf32> to vector<16x128xf32>
    %97 = arith.mulf %95, %96 : vector<16x128xf32>
    %98 = arith.addf %92, %97 : vector<16x128xf32>
    %c16_24 = arith.constant 16 : index
    %c11 = arith.constant 11 : index
    %99 = vector.load %arg2[%c16_24, %c11] : memref<46x21xf32, #tpu.memory_space<vmem>>, vector<16x1xf32>
    %100 = vector.extract_strided_slice %29 {offsets = [11, 0], sizes = [1, 128], strides = [1, 1]} : vector<16x128xf32> to vector<1x128xf32>
    %101 = vector.broadcast %99 : vector<16x1xf32> to vector<16x128xf32>
    %102 = vector.broadcast %100 : vector<1x128xf32> to vector<16x128xf32>
    %103 = arith.mulf %101, %102 : vector<16x128xf32>
    %104 = arith.addf %98, %103 : vector<16x128xf32>
    %c16_25 = arith.constant 16 : index
    %c12 = arith.constant 12 : index
    %105 = vector.load %arg2[%c16_25, %c12] : memref<46x21xf32, #tpu.memory_space<vmem>>, vector<16x1xf32>
    %106 = vector.extract_strided_slice %29 {offsets = [12, 0], sizes = [1, 128], strides = [1, 1]} : vector<16x128xf32> to vector<1x128xf32>
    %107 = vector.broadcast %105 : vector<16x1xf32> to vector<16x128xf32>
    %108 = vector.broadcast %106 : vector<1x128xf32> to vector<16x128xf32>
    %109 = arith.mulf %107, %108 : vector<16x128xf32>
    %110 = arith.addf %104, %109 : vector<16x128xf32>
    %c16_26 = arith.constant 16 : index
    %c13 = arith.constant 13 : index
    %111 = vector.load %arg2[%c16_26, %c13] : memref<46x21xf32, #tpu.memory_space<vmem>>, vector<16x1xf32>
    %112 = vector.extract_strided_slice %29 {offsets = [13, 0], sizes = [1, 128], strides = [1, 1]} : vector<16x128xf32> to vector<1x128xf32>
    %113 = vector.broadcast %111 : vector<16x1xf32> to vector<16x128xf32>
    %114 = vector.broadcast %112 : vector<1x128xf32> to vector<16x128xf32>
    %115 = arith.mulf %113, %114 : vector<16x128xf32>
    %116 = arith.addf %110, %115 : vector<16x128xf32>
    %c16_27 = arith.constant 16 : index
    %c14 = arith.constant 14 : index
    %117 = vector.load %arg2[%c16_27, %c14] : memref<46x21xf32, #tpu.memory_space<vmem>>, vector<16x1xf32>
    %118 = vector.extract_strided_slice %29 {offsets = [14, 0], sizes = [1, 128], strides = [1, 1]} : vector<16x128xf32> to vector<1x128xf32>
    %119 = vector.broadcast %117 : vector<16x1xf32> to vector<16x128xf32>
    %120 = vector.broadcast %118 : vector<1x128xf32> to vector<16x128xf32>
    %121 = arith.mulf %119, %120 : vector<16x128xf32>
    %122 = arith.addf %116, %121 : vector<16x128xf32>
    %c16_28 = arith.constant 16 : index
    %c15 = arith.constant 15 : index
    %123 = vector.load %arg2[%c16_28, %c15] : memref<46x21xf32, #tpu.memory_space<vmem>>, vector<16x1xf32>
    %124 = vector.extract_strided_slice %29 {offsets = [15, 0], sizes = [1, 128], strides = [1, 1]} : vector<16x128xf32> to vector<1x128xf32>
    %125 = vector.broadcast %123 : vector<16x1xf32> to vector<16x128xf32>
    %126 = vector.broadcast %124 : vector<1x128xf32> to vector<16x128xf32>
    %127 = arith.mulf %125, %126 : vector<16x128xf32>
    %128 = arith.addf %122, %127 : vector<16x128xf32>
    %cst_29 = arith.constant 0.000000e+00 : f32
    %129 = vector.broadcast %cst_29 : f32 to vector<16x128xf32>
    %130 = arith.maximumf %128, %129 : vector<16x128xf32>
    %c32 = arith.constant 32 : index
    %c20 = arith.constant 20 : index
    %131 = vector.load %arg2[%c32, %c20] : memref<46x21xf32, #tpu.memory_space<vmem>>, vector<14x1xf32>
    %132 = vector.shape_cast %131 : vector<14x1xf32> to vector<14x1xf32>
    %133 = vector.broadcast %132 : vector<14x1xf32> to vector<14x128xf32>
    %c32_30 = arith.constant 32 : index
    %c0_31 = arith.constant 0 : index
    %134 = vector.load %arg2[%c32_30, %c0_31] : memref<46x21xf32, #tpu.memory_space<vmem>>, vector<14x1xf32>
    %135 = vector.extract_strided_slice %0 {offsets = [0, 0], sizes = [1, 128], strides = [1, 1]} : vector<4x128xf32> to vector<1x128xf32>
    %136 = vector.broadcast %134 : vector<14x1xf32> to vector<14x128xf32>
    %137 = vector.broadcast %135 : vector<1x128xf32> to vector<14x128xf32>
    %138 = arith.mulf %136, %137 : vector<14x128xf32>
    %139 = arith.addf %133, %138 : vector<14x128xf32>
    %c32_32 = arith.constant 32 : index
    %c1_33 = arith.constant 1 : index
    %140 = vector.load %arg2[%c32_32, %c1_33] : memref<46x21xf32, #tpu.memory_space<vmem>>, vector<14x1xf32>
    %141 = vector.extract_strided_slice %0 {offsets = [1, 0], sizes = [1, 128], strides = [1, 1]} : vector<4x128xf32> to vector<1x128xf32>
    %142 = vector.broadcast %140 : vector<14x1xf32> to vector<14x128xf32>
    %143 = vector.broadcast %141 : vector<1x128xf32> to vector<14x128xf32>
    %144 = arith.mulf %142, %143 : vector<14x128xf32>
    %145 = arith.addf %139, %144 : vector<14x128xf32>
    %c32_34 = arith.constant 32 : index
    %c2_35 = arith.constant 2 : index
    %146 = vector.load %arg2[%c32_34, %c2_35] : memref<46x21xf32, #tpu.memory_space<vmem>>, vector<14x1xf32>
    %147 = vector.extract_strided_slice %0 {offsets = [2, 0], sizes = [1, 128], strides = [1, 1]} : vector<4x128xf32> to vector<1x128xf32>
    %148 = vector.broadcast %146 : vector<14x1xf32> to vector<14x128xf32>
    %149 = vector.broadcast %147 : vector<1x128xf32> to vector<14x128xf32>
    %150 = arith.mulf %148, %149 : vector<14x128xf32>
    %151 = arith.addf %145, %150 : vector<14x128xf32>
    %c32_36 = arith.constant 32 : index
    %c3_37 = arith.constant 3 : index
    %152 = vector.load %arg2[%c32_36, %c3_37] : memref<46x21xf32, #tpu.memory_space<vmem>>, vector<14x1xf32>
    %153 = vector.extract_strided_slice %0 {offsets = [3, 0], sizes = [1, 128], strides = [1, 1]} : vector<4x128xf32> to vector<1x128xf32>
    %154 = vector.broadcast %152 : vector<14x1xf32> to vector<14x128xf32>
    %155 = vector.broadcast %153 : vector<1x128xf32> to vector<14x128xf32>
    %156 = arith.mulf %154, %155 : vector<14x128xf32>
    %157 = arith.addf %151, %156 : vector<14x128xf32>
    %c32_38 = arith.constant 32 : index
    %c4_39 = arith.constant 4 : index
    %158 = vector.load %arg2[%c32_38, %c4_39] : memref<46x21xf32, #tpu.memory_space<vmem>>, vector<14x1xf32>
    %159 = vector.extract_strided_slice %130 {offsets = [0, 0], sizes = [1, 128], strides = [1, 1]} : vector<16x128xf32> to vector<1x128xf32>
    %160 = vector.broadcast %158 : vector<14x1xf32> to vector<14x128xf32>
    %161 = vector.broadcast %159 : vector<1x128xf32> to vector<14x128xf32>
    %162 = arith.mulf %160, %161 : vector<14x128xf32>
    %163 = arith.addf %157, %162 : vector<14x128xf32>
    %c32_40 = arith.constant 32 : index
    %c5_41 = arith.constant 5 : index
    %164 = vector.load %arg2[%c32_40, %c5_41] : memref<46x21xf32, #tpu.memory_space<vmem>>, vector<14x1xf32>
    %165 = vector.extract_strided_slice %130 {offsets = [1, 0], sizes = [1, 128], strides = [1, 1]} : vector<16x128xf32> to vector<1x128xf32>
    %166 = vector.broadcast %164 : vector<14x1xf32> to vector<14x128xf32>
    %167 = vector.broadcast %165 : vector<1x128xf32> to vector<14x128xf32>
    %168 = arith.mulf %166, %167 : vector<14x128xf32>
    %169 = arith.addf %163, %168 : vector<14x128xf32>
    %c32_42 = arith.constant 32 : index
    %c6_43 = arith.constant 6 : index
    %170 = vector.load %arg2[%c32_42, %c6_43] : memref<46x21xf32, #tpu.memory_space<vmem>>, vector<14x1xf32>
    %171 = vector.extract_strided_slice %130 {offsets = [2, 0], sizes = [1, 128], strides = [1, 1]} : vector<16x128xf32> to vector<1x128xf32>
    %172 = vector.broadcast %170 : vector<14x1xf32> to vector<14x128xf32>
    %173 = vector.broadcast %171 : vector<1x128xf32> to vector<14x128xf32>
    %174 = arith.mulf %172, %173 : vector<14x128xf32>
    %175 = arith.addf %169, %174 : vector<14x128xf32>
    %c32_44 = arith.constant 32 : index
    %c7_45 = arith.constant 7 : index
    %176 = vector.load %arg2[%c32_44, %c7_45] : memref<46x21xf32, #tpu.memory_space<vmem>>, vector<14x1xf32>
    %177 = vector.extract_strided_slice %130 {offsets = [3, 0], sizes = [1, 128], strides = [1, 1]} : vector<16x128xf32> to vector<1x128xf32>
    %178 = vector.broadcast %176 : vector<14x1xf32> to vector<14x128xf32>
    %179 = vector.broadcast %177 : vector<1x128xf32> to vector<14x128xf32>
    %180 = arith.mulf %178, %179 : vector<14x128xf32>
    %181 = arith.addf %175, %180 : vector<14x128xf32>
    %c32_46 = arith.constant 32 : index
    %c8_47 = arith.constant 8 : index
    %182 = vector.load %arg2[%c32_46, %c8_47] : memref<46x21xf32, #tpu.memory_space<vmem>>, vector<14x1xf32>
    %183 = vector.extract_strided_slice %130 {offsets = [4, 0], sizes = [1, 128], strides = [1, 1]} : vector<16x128xf32> to vector<1x128xf32>
    %184 = vector.broadcast %182 : vector<14x1xf32> to vector<14x128xf32>
    %185 = vector.broadcast %183 : vector<1x128xf32> to vector<14x128xf32>
    %186 = arith.mulf %184, %185 : vector<14x128xf32>
    %187 = arith.addf %181, %186 : vector<14x128xf32>
    %c32_48 = arith.constant 32 : index
    %c9_49 = arith.constant 9 : index
    %188 = vector.load %arg2[%c32_48, %c9_49] : memref<46x21xf32, #tpu.memory_space<vmem>>, vector<14x1xf32>
    %189 = vector.extract_strided_slice %130 {offsets = [5, 0], sizes = [1, 128], strides = [1, 1]} : vector<16x128xf32> to vector<1x128xf32>
    %190 = vector.broadcast %188 : vector<14x1xf32> to vector<14x128xf32>
    %191 = vector.broadcast %189 : vector<1x128xf32> to vector<14x128xf32>
    %192 = arith.mulf %190, %191 : vector<14x128xf32>
    %193 = arith.addf %187, %192 : vector<14x128xf32>
    %c32_50 = arith.constant 32 : index
    %c10_51 = arith.constant 10 : index
    %194 = vector.load %arg2[%c32_50, %c10_51] : memref<46x21xf32, #tpu.memory_space<vmem>>, vector<14x1xf32>
    %195 = vector.extract_strided_slice %130 {offsets = [6, 0], sizes = [1, 128], strides = [1, 1]} : vector<16x128xf32> to vector<1x128xf32>
    %196 = vector.broadcast %194 : vector<14x1xf32> to vector<14x128xf32>
    %197 = vector.broadcast %195 : vector<1x128xf32> to vector<14x128xf32>
    %198 = arith.mulf %196, %197 : vector<14x128xf32>
    %199 = arith.addf %193, %198 : vector<14x128xf32>
    %c32_52 = arith.constant 32 : index
    %c11_53 = arith.constant 11 : index
    %200 = vector.load %arg2[%c32_52, %c11_53] : memref<46x21xf32, #tpu.memory_space<vmem>>, vector<14x1xf32>
    %201 = vector.extract_strided_slice %130 {offsets = [7, 0], sizes = [1, 128], strides = [1, 1]} : vector<16x128xf32> to vector<1x128xf32>
    %202 = vector.broadcast %200 : vector<14x1xf32> to vector<14x128xf32>
    %203 = vector.broadcast %201 : vector<1x128xf32> to vector<14x128xf32>
    %204 = arith.mulf %202, %203 : vector<14x128xf32>
    %205 = arith.addf %199, %204 : vector<14x128xf32>
    %c32_54 = arith.constant 32 : index
    %c12_55 = arith.constant 12 : index
    %206 = vector.load %arg2[%c32_54, %c12_55] : memref<46x21xf32, #tpu.memory_space<vmem>>, vector<14x1xf32>
    %207 = vector.extract_strided_slice %130 {offsets = [8, 0], sizes = [1, 128], strides = [1, 1]} : vector<16x128xf32> to vector<1x128xf32>
    %208 = vector.broadcast %206 : vector<14x1xf32> to vector<14x128xf32>
    %209 = vector.broadcast %207 : vector<1x128xf32> to vector<14x128xf32>
    %210 = arith.mulf %208, %209 : vector<14x128xf32>
    %211 = arith.addf %205, %210 : vector<14x128xf32>
    %c32_56 = arith.constant 32 : index
    %c13_57 = arith.constant 13 : index
    %212 = vector.load %arg2[%c32_56, %c13_57] : memref<46x21xf32, #tpu.memory_space<vmem>>, vector<14x1xf32>
    %213 = vector.extract_strided_slice %130 {offsets = [9, 0], sizes = [1, 128], strides = [1, 1]} : vector<16x128xf32> to vector<1x128xf32>
    %214 = vector.broadcast %212 : vector<14x1xf32> to vector<14x128xf32>
    %215 = vector.broadcast %213 : vector<1x128xf32> to vector<14x128xf32>
    %216 = arith.mulf %214, %215 : vector<14x128xf32>
    %217 = arith.addf %211, %216 : vector<14x128xf32>
    %c32_58 = arith.constant 32 : index
    %c14_59 = arith.constant 14 : index
    %218 = vector.load %arg2[%c32_58, %c14_59] : memref<46x21xf32, #tpu.memory_space<vmem>>, vector<14x1xf32>
    %219 = vector.extract_strided_slice %130 {offsets = [10, 0], sizes = [1, 128], strides = [1, 1]} : vector<16x128xf32> to vector<1x128xf32>
    %220 = vector.broadcast %218 : vector<14x1xf32> to vector<14x128xf32>
    %221 = vector.broadcast %219 : vector<1x128xf32> to vector<14x128xf32>
    %222 = arith.mulf %220, %221 : vector<14x128xf32>
    %223 = arith.addf %217, %222 : vector<14x128xf32>
    %c32_60 = arith.constant 32 : index
    %c15_61 = arith.constant 15 : index
    %224 = vector.load %arg2[%c32_60, %c15_61] : memref<46x21xf32, #tpu.memory_space<vmem>>, vector<14x1xf32>
    %225 = vector.extract_strided_slice %130 {offsets = [11, 0], sizes = [1, 128], strides = [1, 1]} : vector<16x128xf32> to vector<1x128xf32>
    %226 = vector.broadcast %224 : vector<14x1xf32> to vector<14x128xf32>
    %227 = vector.broadcast %225 : vector<1x128xf32> to vector<14x128xf32>
    %228 = arith.mulf %226, %227 : vector<14x128xf32>
    %229 = arith.addf %223, %228 : vector<14x128xf32>
    %c32_62 = arith.constant 32 : index
    %c16_63 = arith.constant 16 : index
    %230 = vector.load %arg2[%c32_62, %c16_63] : memref<46x21xf32, #tpu.memory_space<vmem>>, vector<14x1xf32>
    %231 = vector.extract_strided_slice %130 {offsets = [12, 0], sizes = [1, 128], strides = [1, 1]} : vector<16x128xf32> to vector<1x128xf32>
    %232 = vector.broadcast %230 : vector<14x1xf32> to vector<14x128xf32>
    %233 = vector.broadcast %231 : vector<1x128xf32> to vector<14x128xf32>
    %234 = arith.mulf %232, %233 : vector<14x128xf32>
    %235 = arith.addf %229, %234 : vector<14x128xf32>
    %c32_64 = arith.constant 32 : index
    %c17 = arith.constant 17 : index
    %236 = vector.load %arg2[%c32_64, %c17] : memref<46x21xf32, #tpu.memory_space<vmem>>, vector<14x1xf32>
    %237 = vector.extract_strided_slice %130 {offsets = [13, 0], sizes = [1, 128], strides = [1, 1]} : vector<16x128xf32> to vector<1x128xf32>
    %238 = vector.broadcast %236 : vector<14x1xf32> to vector<14x128xf32>
    %239 = vector.broadcast %237 : vector<1x128xf32> to vector<14x128xf32>
    %240 = arith.mulf %238, %239 : vector<14x128xf32>
    %241 = arith.addf %235, %240 : vector<14x128xf32>
    %c32_65 = arith.constant 32 : index
    %c18 = arith.constant 18 : index
    %242 = vector.load %arg2[%c32_65, %c18] : memref<46x21xf32, #tpu.memory_space<vmem>>, vector<14x1xf32>
    %243 = vector.extract_strided_slice %130 {offsets = [14, 0], sizes = [1, 128], strides = [1, 1]} : vector<16x128xf32> to vector<1x128xf32>
    %244 = vector.broadcast %242 : vector<14x1xf32> to vector<14x128xf32>
    %245 = vector.broadcast %243 : vector<1x128xf32> to vector<14x128xf32>
    %246 = arith.mulf %244, %245 : vector<14x128xf32>
    %247 = arith.addf %241, %246 : vector<14x128xf32>
    %c32_66 = arith.constant 32 : index
    %c19 = arith.constant 19 : index
    %248 = vector.load %arg2[%c32_66, %c19] : memref<46x21xf32, #tpu.memory_space<vmem>>, vector<14x1xf32>
    %249 = vector.extract_strided_slice %130 {offsets = [15, 0], sizes = [1, 128], strides = [1, 1]} : vector<16x128xf32> to vector<1x128xf32>
    %250 = vector.broadcast %248 : vector<14x1xf32> to vector<14x128xf32>
    %251 = vector.broadcast %249 : vector<1x128xf32> to vector<14x128xf32>
    %252 = arith.mulf %250, %251 : vector<14x128xf32>
    %253 = arith.addf %247, %252 : vector<14x128xf32>
    %c0_67 = arith.constant 0 : index
    %c0_68 = arith.constant 0 : index
    %254 = vector.load %arg3[%c0_67, %c0_68] : memref<14x128xf32, #tpu.memory_space<vmem>>, vector<14x128xf32>
    tpu.vector_store %arg3[%c0_67, %c0_68], %253 {strides = array<i32>} : memref<14x128xf32, #tpu.memory_space<vmem>>, vector<14x128xf32>,
    return
  }
  func.func @transform_0(%arg0: i32) -> (i32, i32) {
    %c0_i32 = arith.constant 0 : i32
    %c0_i32_0 = arith.constant 0 : i32
    return %c0_i32, %arg0 : i32, i32
  }
  func.func @transform_1(%arg0: i32) -> (i32, i32) {
    %c0_i32 = arith.constant 0 : i32
    %c0_i32_0 = arith.constant 0 : i32
    %c0_i32_1 = arith.constant 0 : i32
    return %c0_i32, %c0_i32_0 : i32, i32
  }
  func.func @transform_2(%arg0: i32) -> (i32, i32) {
    %c0_i32 = arith.constant 0 : i32
    %c0_i32_0 = arith.constant 0 : i32
    return %c0_i32, %arg0 : i32, i32
  }
}

</mosaic_0001>

<llo_original>
// kernel: supernet_forward.1
$region0: #{supernet_forward.1}
  #allocation0 [shape = 'u32[]', space=smem, size = 0x4, offset = 0x4, fixed_abs, tag = 'smem constant byte address 0x4 - core index']
  #allocation1 [shape = 'u32[144,128]{1,0:T(1,128)}', space=vmem, size = 0x12000, scoped, tag = 'internal scratch']
  %s0 = inlined_call_operand.vmem [shape: f32[4,256], index: 0, kind: input, shape index: {}]
  %s1 = inlined_call_operand.vmem [shape: f32[46,21], index: 1, kind: input, shape index: {}]
  %s2 = inlined_call_operand.vmem [shape: f32[14,256], index: 2, kind: output, shape index: {}]
  %s3 = sld [smem:[#allocation0]]
  $region75: #{supernet_forward.1} parent=0
    _
  %s5 = ssub.s32 1, %s3
  %s6 = scalar_select 0, %s5, %s3
  $region1: #{supernet_forward.1} parent=0
    #allocation2 [shape = 'u8[16384]{0}', space=vmem, size = 0x4000, scoped, tag = 'output window, operand 0']
    loop: start=0, step=1, limit=4
    $region2: #{supernet_forward.1} parent=1 // loop_pre_header
      _
    $region3: #{supernet_forward.1} parent=1 // loop_header
      %s8 = sphi 0, %s12
      %p9 = scmp.ge.s32.totalorder %s8, 4
      %s18 = sphi 0, %s20
      %s21 = sphi 0, %s18
      %s22 = sphi 0, %s21
      %s38 = sphi 0, %s22
      %s42 = sphi 0, %s42
      %s44 = sphi 0, %s42
      %s45 = sphi 0, %s44
      %s59 = sphi 0, %s45
      %s65 = sphi 0, %s67
      %s68 = sphi 0, %s65
      %s69 = sphi 0, %s68
      %s85 = sphi 0, %s69
    $region4: #{supernet_forward.1} parent=1 // loop_header_branch
      %11 = sbr.rel (%p9) target = $region8
    $region5: #{supernet_forward.1} parent=1 // loop_body
      %s13 = ssub.s32 %s8, 1
      %s14 = ssub.s32 %s8, 2
      %s15 = sadd.s32 %s8, 1
      %s16 = ssub.s32 %s8, %s15
      %p17 = scmp.eq.s32.totalorder %s16, 0
      %s19 = sadd.s32 %s18, 1
      %s20 = scalar_select %p17, %s18, %s19
      %p23 = pneg %p17
      %p24 = scmp.eq.s32.totalorder %s8, 1
      %p25 = por %p23, %p24
      %p26 = scmp.ne.s32.totalorder %s18, %s21
      %p27 = scmp.eq.s32.totalorder %s8, 0
      %p28 = por %p26, %p27
      %p29 = scmp.ne.s32.totalorder %s18, %s21
      %p30 = scmp.eq.s32.totalorder %s13, 1
      %p31 = por %p29, %p30
      %p32 = scmp.ne.s32.totalorder %s21, %s22
      %p33 = scmp.eq.s32.totalorder %s13, 0
      %p34 = por %p32, %p33
      %p35 = scmp.ne.s32.totalorder %s21, %s22
      %p36 = scmp.eq.s32.totalorder %s14, 1
      %p37 = por %p35, %p36
      %p39 = scmp.ne.s32.totalorder %s22, %s38
      %p40 = scmp.eq.s32.totalorder %s14, 0
      %p41 = por %p39, %p40
      %s43 = sadd.s32 %s42, 1
      %p46 = scmp.eq.s32.totalorder %s8, 1
      %p47 = scmp.ne.s32.totalorder %s42, %s44
      %p48 = scmp.eq.s32.totalorder %s8, 0
      %p49 = por %p47, %p48
      %p50 = scmp.ne.s32.totalorder %s42, %s44
      %p51 = scmp.eq.s32.totalorder %s13, 1
      %p52 = por %p50, %p51
      %p53 = scmp.ne.s32.totalorder %s44, %s45
      %p54 = scmp.eq.s32.totalorder %s13, 0
      %p55 = por %p53, %p54
      %p56 = scmp.ne.s32.totalorder %s44, %s45
      %p57 = scmp.eq.s32.totalorder %s14, 1
      %p58 = por %p56, %p57
      %p60 = scmp.ne.s32.totalorder %s45, %s59
      %p61 = scmp.eq.s32.totalorder %s14, 0
      %p62 = por %p60, %p61
      %s63 = ssub.s32 %s8, %s15
      %p64 = scmp.eq.s32.totalorder %s63, 0
      %s66 = sadd.s32 %s65, 1
      %s67 = scalar_select %p64, %s65, %s66
      %p70 = pneg %p64
      %p71 = scmp.eq.s32.totalorder %s8, 1
      %p72 = por %p70, %p71
      %p73 = scmp.ne.s32.totalorder %s65, %s68
      %p74 = scmp.eq.s32.totalorder %s8, 0
      %p75 = por %p73, %p74
      %p76 = scmp.ne.s32.totalorder %s65, %s68
      %p77 = scmp.eq.s32.totalorder %s13, 1
      %p78 = por %p76, %p77
      %p79 = scmp.ne.s32.totalorder %s68, %s69
      %p80 = scmp.eq.s32.totalorder %s13, 0
      %p81 = por %p79, %p80
      %p82 = scmp.ne.s32.totalorder %s68, %s69
      %p83 = scmp.eq.s32.totalorder %s14, 1
      %p84 = por %p82, %p83
      %p86 = scmp.ne.s32.totalorder %s69, %s85
      %p87 = scmp.eq.s32.totalorder %s14, 0
      %p88 = por %p86, %p87
      %p89 = scmp.le.s32.totalorder 1, %s8
      %p90 = scmp.lt.s32.totalorder %s8, 3
      %p91 = pnand %p89, %p90
      %p92 = pneg %p91
      // Predicated region
      $region9: #{supernet_forward.1} parent=5 // pred_check
        _
      $region10: #{supernet_forward.1} parent=5 // pred_check_branch
        %94 = sbr.rel (%p91) target = $region12
      $region11: #{supernet_forward.1} parent=5 // pred_region
        %s95 = ssub.s32 %s8, 1
        // Predicated region
        $region13: #{supernet_forward.1} parent=11 // pred_check
          %p96 = pneg %p55
        $region14: #{supernet_forward.1} parent=11 // pred_check_branch
          %98 = sbr.rel (%p96) target = $region16
        $region15: #{supernet_forward.1} parent=11 // pred_region
          _
        $region16: #{supernet_forward.1} parent=11 // pred_fallthru
          _
      $region12: #{supernet_forward.1} parent=5 // pred_fallthru
        _
      %p99 = scmp.lt.s32.totalorder %s8, 2
      // Predicated region
      $region17: #{supernet_forward.1} parent=5 // pred_check
        %p100 = pneg %p99
      $region18: #{supernet_forward.1} parent=5 // pred_check_branch
        %102 = sbr.rel (%p100) target = $region20
      $region19: #{supernet_forward.1} parent=5 // pred_region
        // Predicated region
        $region21: #{supernet_forward.1} parent=19 // pred_check
          %p103 = pneg %p28
        $region22: #{supernet_forward.1} parent=19 // pred_check_branch
          %105 = sbr.rel (%p103) target = $region24
        $region23: #{supernet_forward.1} parent=19 // pred_region
          %p106 = scmp.lt.s32.totalorder %s8, 1
          %s107 = scalar_select %p106, %s8, 1
          %s108 = smul.addr %s107, 4
          %s109 = scalar_lea.vmem %s0, %s108
        $region24: #{supernet_forward.1} parent=19 // pred_fallthru
          _
      $region20: #{supernet_forward.1} parent=5 // pred_fallthru
        _
      %p110 = scmp.le.s32.totalorder 1, %s8
      %p111 = scmp.lt.s32.totalorder %s8, 3
      %p112 = pnand %p110, %p111
      %p113 = pneg %p112
      // Predicated region
      $region25: #{supernet_forward.1} parent=5 // pred_check
        _
      $region26: #{supernet_forward.1} parent=5 // pred_check_branch
        %115 = sbr.rel (%p112) target = $region28
      $region27: #{supernet_forward.1} parent=5 // pred_region
        %s116 = ssub.s32 %s8, 1
        %p117 = scmp.lt.s32.totalorder %s13, 1
        %s118 = scalar_select %p117, %s13, 1
        %s119 = smul.addr %s118, 4
        %s120 = scalar_lea.vmem %s0, %s119
        %p121 = pneg %p34
        %p122 = pneg %p31
        %p123 = pneg %p55
        %p124 = pneg %p52
        %p125 = pneg %p81
        %p126 = pneg %p78
        %s127 = sand.u32 %s68, 1
        %s128 = sand.u32 %s68, 1
        %s129 = smul.addr %s128, 16
        %s130 = scalar_lea.vmem [#allocation2], %s129
        %p131 = scmp.lt.s32.totalorder %s13, 1
        %s132 = scalar_select %p131, %s13, 1
        %s133 = smul.addr %s132, 4
        %s134 = scalar_lea.vmem %s0, %s133
        %v135 = vld [vmem:[%s134] sm:$0xf]
        %v136 = vld [vmem:[%s1] sm:$0xff]
        %v137 = vld [vmem:[%s1 + $0x8] sm:$0xff]
        %139 = vset.pattern.permute.xlu0 4
        %140 = vperm.xlu0 %139, %v136
        %v141 = vpop.permute.xlu0 %140
        %144 = vset.pattern.permute.xlu0 4
        %145 = vperm.xlu0 %144, %v137
        %v146 = vpop.permute.xlu0 %145
        %148 = vset.pattern.permute.xlu0 0
        %149 = vperm.xlu0 %148, %v136
        %v150 = vpop.permute.xlu0 %149
        %152 = vset.pattern.permute.xlu0 0
        %153 = vperm.xlu0 %152, %v137
        %v154 = vpop.permute.xlu0 %153
        %v156 = vlaneseq
        %v157 = vshrl.u32 %v156, 7
        %v158 = vsub.s32 0, %v157
        %v159 = vrot.slane %v135, %v158
        %v160 = vmul.f32 %v150, %v159
        %v161 = vmul.f32 %v154, %v159
        %v162 = vadd.f32 %v141, %v160
        %v163 = vadd.f32 %v146, %v161
        %164 = vset.pattern.permute.xlu0 1
        %165 = vperm.xlu0 %164, %v136
        %v166 = vpop.permute.xlu0 %165
        %168 = vset.pattern.permute.xlu0 1
        %169 = vperm.xlu0 %168, %v137
        %v170 = vpop.permute.xlu0 %169
        %v172 = vlaneseq
        %v173 = vshrl.u32 %v172, 7
        %v174 = vsub.s32 1, %v173
        %v175 = vrot.slane %v135, %v174
        %v176 = vmul.f32 %v166, %v175
        %v177 = vmul.f32 %v170, %v175
        %v178 = vadd.f32 %v162, %v176
        %v179 = vadd.f32 %v163, %v177
        %180 = vset.pattern.permute.xlu0 2
        %181 = vperm.xlu0 %180, %v136
        %v182 = vpop.permute.xlu0 %181
        %184 = vset.pattern.permute.xlu0 2
        %185 = vperm.xlu0 %184, %v137
        %v186 = vpop.permute.xlu0 %185
        %v188 = vlaneseq
        %v189 = vshrl.u32 %v188, 7
        %v190 = vsub.s32 2, %v189
        %v191 = vrot.slane %v135, %v190
        %v192 = vmul.f32 %v182, %v191
        %v193 = vmul.f32 %v186, %v191
        %v194 = vadd.f32 %v178, %v192
        %v195 = vadd.f32 %v179, %v193
        %196 = vset.pattern.permute.xlu0 3
        %197 = vperm.xlu0 %196, %v136
        %v198 = vpop.permute.xlu0 %197
        %200 = vset.pattern.permute.xlu0 3
        %201 = vperm.xlu0 %200, %v137
        %v202 = vpop.permute.xlu0 %201
        %v204 = vlaneseq
        %v205 = vshrl.u32 %v204, 7
        %v206 = vsub.s32 3, %v205
        %v207 = vrot.slane %v135, %v206
        %v208 = vmul.f32 %v198, %v207
        %v209 = vmul.f32 %v202, %v207
        %v210 = vadd.f32 %v194, %v208
        %v211 = vadd.f32 %v195, %v209
        %v212 = vmax.f32 %v210, 0.0
        %v213 = vmax.f32 %v211, 0.0
        %v214 = vld [vmem:[%s1 + $0x10] sm:$0xff]
        %v215 = vld [vmem:[%s1 + $0x18] sm:$0xff]
        %217 = vset.pattern.permute.xlu0 16
        %218 = vperm.xlu0 %217, %v214
        %v219 = vpop.permute.xlu0 %218
        %222 = vset.pattern.permute.xlu0 16
        %223 = vperm.xlu0 %222, %v215
        %v224 = vpop.permute.xlu0 %223
        %226 = vset.pattern.permute.xlu0 0
        %227 = vperm.xlu0 %226, %v214
        %v228 = vpop.permute.xlu0 %227
        %230 = vset.pattern.permute.xlu0 0
        %231 = vperm.xlu0 %230, %v215
        %v232 = vpop.permute.xlu0 %231
        %v234 = vlaneseq
        %v235 = vshrl.u32 %v234, 7
        %v236 = vsub.s32 0, %v235
        %v237 = vrot.slane %v212, %v236
        %v238 = vmul.f32 %v228, %v237
        %v239 = vmul.f32 %v232, %v237
        %v240 = vadd.f32 %v219, %v238
        %v241 = vadd.f32 %v224, %v239
        %242 = vset.pattern.permute.xlu0 1
        %243 = vperm.xlu0 %242, %v214
        %v244 = vpop.permute.xlu0 %243
        %246 = vset.pattern.permute.xlu0 1
        %247 = vperm.xlu0 %246, %v215
        %v248 = vpop.permute.xlu0 %247
        %v250 = vlaneseq
        %v251 = vshrl.u32 %v250, 7
        %v252 = vsub.s32 1, %v251
        %v253 = vrot.slane %v212, %v252
        %v254 = vmul.f32 %v244, %v253
        %v255 = vmul.f32 %v248, %v253
        %v256 = vadd.f32 %v240, %v254
        %v257 = vadd.f32 %v241, %v255
        %258 = vset.pattern.permute.xlu0 2
        %259 = vperm.xlu0 %258, %v214
        %v260 = vpop.permute.xlu0 %259
        %262 = vset.pattern.permute.xlu0 2
        %263 = vperm.xlu0 %262, %v215
        %v264 = vpop.permute.xlu0 %263
        %v266 = vlaneseq
        %v267 = vshrl.u32 %v266, 7
        %v268 = vsub.s32 2, %v267
        %v269 = vrot.slane %v212, %v268
        %v270 = vmul.f32 %v260, %v269
        %v271 = vmul.f32 %v264, %v269
        %v272 = vadd.f32 %v256, %v270
        %v273 = vadd.f32 %v257, %v271
        %274 = vset.pattern.permute.xlu0 3
        %275 = vperm.xlu0 %274, %v214
        %v276 = vpop.permute.xlu0 %275
        %278 = vset.pattern.permute.xlu0 3
        %279 = vperm.xlu0 %278, %v215
        %v280 = vpop.permute.xlu0 %279
        %v282 = vlaneseq
        %v283 = vshrl.u32 %v282, 7
        %v284 = vsub.s32 3, %v283
        %v285 = vrot.slane %v212, %v284
        %v286 = vmul.f32 %v276, %v285
        %v287 = vmul.f32 %v280, %v285
        %v288 = vadd.f32 %v272, %v286
        %v289 = vadd.f32 %v273, %v287
        %290 = vset.pattern.permute.xlu0 4
        %291 = vperm.xlu0 %290, %v214
        %v292 = vpop.permute.xlu0 %291
        %294 = vset.pattern.permute.xlu0 4
        %295 = vperm.xlu0 %294, %v215
        %v296 = vpop.permute.xlu0 %295
        %v298 = vlaneseq
        %v299 = vshrl.u32 %v298, 7
        %v300 = vsub.s32 4, %v299
        %v301 = vrot.slane %v212, %v300
        %v302 = vmul.f32 %v292, %v301
        %v303 = vmul.f32 %v296, %v301
        %v304 = vadd.f32 %v288, %v302
        %v305 = vadd.f32 %v289, %v303
        %306 = vset.pattern.permute.xlu0 5
        %307 = vperm.xlu0 %306, %v214
        %v308 = vpop.permute.xlu0 %307
        %310 = vset.pattern.permute.xlu0 5
        %311 = vperm.xlu0 %310, %v215
        %v312 = vpop.permute.xlu0 %311
        %v314 = vlaneseq
        %v315 = vshrl.u32 %v314, 7
        %v316 = vsub.s32 5, %v315
        %v317 = vrot.slane %v212, %v316
        %v318 = vmul.f32 %v308, %v317
        %v319 = vmul.f32 %v312, %v317
        %v320 = vadd.f32 %v304, %v318
        %v321 = vadd.f32 %v305, %v319
        %322 = vset.pattern.permute.xlu0 6
        %323 = vperm.xlu0 %322, %v214
        %v324 = vpop.permute.xlu0 %323
        %326 = vset.pattern.permute.xlu0 6
        %327 = vperm.xlu0 %326, %v215
        %v328 = vpop.permute.xlu0 %327
        %v330 = vlaneseq
        %v331 = vshrl.u32 %v330, 7
        %v332 = vsub.s32 6, %v331
        %v333 = vrot.slane %v212, %v332
        %v334 = vmul.f32 %v324, %v333
        %v335 = vmul.f32 %v328, %v333
        %v336 = vadd.f32 %v320, %v334
        %v337 = vadd.f32 %v321, %v335
        %338 = vset.pattern.permute.xlu0 7
        %339 = vperm.xlu0 %338, %v214
        %v340 = vpop.permute.xlu0 %339
        %342 = vset.pattern.permute.xlu0 7
        %343 = vperm.xlu0 %342, %v215
        %v344 = vpop.permute.xlu0 %343
        %v346 = vlaneseq
        %v347 = vshrl.u32 %v346, 7
        %v348 = vsub.s32 7, %v347
        %v349 = vrot.slane %v212, %v348
        %v350 = vmul.f32 %v340, %v349
        %v351 = vmul.f32 %v344, %v349
        %v352 = vadd.f32 %v336, %v350
        %v353 = vadd.f32 %v337, %v351
        %354 = vset.pattern.permute.xlu0 8
        %355 = vperm.xlu0 %354, %v214
        %v356 = vpop.permute.xlu0 %355
        %358 = vset.pattern.permute.xlu0 8
        %359 = vperm.xlu0 %358, %v215
        %v360 = vpop.permute.xlu0 %359
        %v362 = vlaneseq
        %v363 = vshrl.u32 %v362, 7
        %v364 = vsub.s32 0, %v363
        %v365 = vrot.slane %v213, %v364
        %v366 = vmul.f32 %v356, %v365
        %v367 = vmul.f32 %v360, %v365
        %v368 = vadd.f32 %v352, %v366
        %v369 = vadd.f32 %v353, %v367
        %370 = vset.pattern.permute.xlu0 9
        %371 = vperm.xlu0 %370, %v214
        %v372 = vpop.permute.xlu0 %371
        %374 = vset.pattern.permute.xlu0 9
        %375 = vperm.xlu0 %374, %v215
        %v376 = vpop.permute.xlu0 %375
        %v378 = vlaneseq
        %v379 = vshrl.u32 %v378, 7
        %v380 = vsub.s32 1, %v379
        %v381 = vrot.slane %v213, %v380
        %v382 = vmul.f32 %v372, %v381
        %v383 = vmul.f32 %v376, %v381
        %v384 = vadd.f32 %v368, %v382
        %v385 = vadd.f32 %v369, %v383
        %386 = vset.pattern.permute.xlu0 10
        %387 = vperm.xlu0 %386, %v214
        %v388 = vpop.permute.xlu0 %387
        %390 = vset.pattern.permute.xlu0 10
        %391 = vperm.xlu0 %390, %v215
        %v392 = vpop.permute.xlu0 %391
        %v394 = vlaneseq
        %v395 = vshrl.u32 %v394, 7
        %v396 = vsub.s32 2, %v395
        %v397 = vrot.slane %v213, %v396
        %v398 = vmul.f32 %v388, %v397
        %v399 = vmul.f32 %v392, %v397
        %v400 = vadd.f32 %v384, %v398
        %v401 = vadd.f32 %v385, %v399
        %402 = vset.pattern.permute.xlu0 11
        %403 = vperm.xlu0 %402, %v214
        %v404 = vpop.permute.xlu0 %403
        %406 = vset.pattern.permute.xlu0 11
        %407 = vperm.xlu0 %406, %v215
        %v408 = vpop.permute.xlu0 %407
        %v410 = vlaneseq
        %v411 = vshrl.u32 %v410, 7
        %v412 = vsub.s32 3, %v411
        %v413 = vrot.slane %v213, %v412
        %v414 = vmul.f32 %v404, %v413
        %v415 = vmul.f32 %v408, %v413
        %v416 = vadd.f32 %v400, %v414
        %v417 = vadd.f32 %v401, %v415
        %418 = vset.pattern.permute.xlu0 12
        %419 = vperm.xlu0 %418, %v214
        %v420 = vpop.permute.xlu0 %419
        %422 = vset.pattern.permute.xlu0 12
        %423 = vperm.xlu0 %422, %v215
        %v424 = vpop.permute.xlu0 %423
        %v426 = vlaneseq
        %v427 = vshrl.u32 %v426, 7
        %v428 = vsub.s32 4, %v427
        %v429 = vrot.slane %v213, %v428
        %v430 = vmul.f32 %v420, %v429
        %v431 = vmul.f32 %v424, %v429
        %v432 = vadd.f32 %v416, %v430
        %v433 = vadd.f32 %v417, %v431
        %434 = vset.pattern.permute.xlu0 13
        %435 = vperm.xlu0 %434, %v214
        %v436 = vpop.permute.xlu0 %435
        %438 = vset.pattern.permute.xlu0 13
        %439 = vperm.xlu0 %438, %v215
        %v440 = vpop.permute.xlu0 %439
        %v442 = vlaneseq
        %v443 = vshrl.u32 %v442, 7
        %v444 = vsub.s32 5, %v443
        %v445 = vrot.slane %v213, %v444
        %v446 = vmul.f32 %v436, %v445
        %v447 = vmul.f32 %v440, %v445
        %v448 = vadd.f32 %v432, %v446
        %v449 = vadd.f32 %v433, %v447
        %450 = vset.pattern.permute.xlu0 14
        %451 = vperm.xlu0 %450, %v214
        %v452 = vpop.permute.xlu0 %451
        %454 = vset.pattern.permute.xlu0 14
        %455 = vperm.xlu0 %454, %v215
        %v456 = vpop.permute.xlu0 %455
        %v458 = vlaneseq
        %v459 = vshrl.u32 %v458, 7
        %v460 = vsub.s32 6, %v459
        %v461 = vrot.slane %v213, %v460
        %v462 = vmul.f32 %v452, %v461
        %v463 = vmul.f32 %v456, %v461
        %v464 = vadd.f32 %v448, %v462
        %v465 = vadd.f32 %v449, %v463
        %466 = vset.pattern.permute.xlu0 15
        %467 = vperm.xlu0 %466, %v214
        %v468 = vpop.permute.xlu0 %467
        %470 = vset.pattern.permute.xlu0 15
        %471 = vperm.xlu0 %470, %v215
        %v472 = vpop.permute.xlu0 %471
        %v474 = vlaneseq
        %v475 = vshrl.u32 %v474, 7
        %v476 = vsub.s32 7, %v475
        %v477 = vrot.slane %v213, %v476
        %v478 = vmul.f32 %v468, %v477
        %v479 = vmul.f32 %v472, %v477
        %v480 = vadd.f32 %v464, %v478
        %v481 = vadd.f32 %v465, %v479
        %v482 = vmax.f32 %v480, 0.0
        %v483 = vmax.f32 %v481, 0.0
        %v484 = vld [vmem:[%s1 + $0x20] sm:$0xff]
        %v485 = vld [vmem:[%s1 + $0x28] sm:$0x3f]
        %487 = vset.pattern.permute.xlu0 20
        %488 = vperm.xlu0 %487, %v484
        %v489 = vpop.permute.xlu0 %488
        %492 = vset.pattern.permute.xlu0 20
        %493 = vperm.xlu0 %492, %v485
        %v494 = vpop.permute.xlu0 %493
        %496 = vset.pattern.permute.xlu0 0
        %497 = vperm.xlu0 %496, %v484
        %v498 = vpop.permute.xlu0 %497
        %500 = vset.pattern.permute.xlu0 0
        %501 = vperm.xlu0 %500, %v485
        %v502 = vpop.permute.xlu0 %501
        %v504 = vmul.f32 %v498, %v159
        %v505 = vmul.f32 %v502, %v159
        %v506 = vadd.f32 %v489, %v504
        %v507 = vadd.f32 %v494, %v505
        %508 = vset.pattern.permute.xlu0 1
        %509 = vperm.xlu0 %508, %v484
        %v510 = vpop.permute.xlu0 %509
        %512 = vset.pattern.permute.xlu0 1
        %513 = vperm.xlu0 %512, %v485
        %v514 = vpop.permute.xlu0 %513
        %v516 = vmul.f32 %v510, %v175
        %v517 = vmul.f32 %v514, %v175
        %v518 = vadd.f32 %v506, %v516
        %v519 = vadd.f32 %v507, %v517
        %520 = vset.pattern.permute.xlu0 2
        %521 = vperm.xlu0 %520, %v484
        %v522 = vpop.permute.xlu0 %521
        %524 = vset.pattern.permute.xlu0 2
        %525 = vperm.xlu0 %524, %v485
        %v526 = vpop.permute.xlu0 %525
        %v528 = vmul.f32 %v522, %v191
        %v529 = vmul.f32 %v526, %v191
        %v530 = vadd.f32 %v518, %v528
        %v531 = vadd.f32 %v519, %v529
        %532 = vset.pattern.permute.xlu0 3
        %533 = vperm.xlu0 %532, %v484
        %v534 = vpop.permute.xlu0 %533
        %536 = vset.pattern.permute.xlu0 3
        %537 = vperm.xlu0 %536, %v485
        %v538 = vpop.permute.xlu0 %537
        %v540 = vmul.f32 %v534, %v207
        %v541 = vmul.f32 %v538, %v207
        %v542 = vadd.f32 %v530, %v540
        %v543 = vadd.f32 %v531, %v541
        %544 = vset.pattern.permute.xlu0 4
        %545 = vperm.xlu0 %544, %v484
        %v546 = vpop.permute.xlu0 %545
        %548 = vset.pattern.permute.xlu0 4
        %549 = vperm.xlu0 %548, %v485
        %v550 = vpop.permute.xlu0 %549
        %v552 = vlaneseq
        %v553 = vshrl.u32 %v552, 7
        %v554 = vsub.s32 0, %v553
        %v555 = vrot.slane %v482, %v554
        %v556 = vmul.f32 %v546, %v555
        %v557 = vmul.f32 %v550, %v555
        %v558 = vadd.f32 %v542, %v556
        %v559 = vadd.f32 %v543, %v557
        %560 = vset.pattern.permute.xlu0 5
        %561 = vperm.xlu0 %560, %v484
        %v562 = vpop.permute.xlu0 %561
        %564 = vset.pattern.permute.xlu0 5
        %565 = vperm.xlu0 %564, %v485
        %v566 = vpop.permute.xlu0 %565
        %v568 = vlaneseq
        %v569 = vshrl.u32 %v568, 7
        %v570 = vsub.s32 1, %v569
        %v571 = vrot.slane %v482, %v570
        %v572 = vmul.f32 %v562, %v571
        %v573 = vmul.f32 %v566, %v571
        %v574 = vadd.f32 %v558, %v572
        %v575 = vadd.f32 %v559, %v573
        %576 = vset.pattern.permute.xlu0 6
        %577 = vperm.xlu0 %576, %v484
        %v578 = vpop.permute.xlu0 %577
        %580 = vset.pattern.permute.xlu0 6
        %581 = vperm.xlu0 %580, %v485
        %v582 = vpop.permute.xlu0 %581
        %v584 = vlaneseq
        %v585 = vshrl.u32 %v584, 7
        %v586 = vsub.s32 2, %v585
        %v587 = vrot.slane %v482, %v586
        %v588 = vmul.f32 %v578, %v587
        %v589 = vmul.f32 %v582, %v587
        %v590 = vadd.f32 %v574, %v588
        %v591 = vadd.f32 %v575, %v589
        %592 = vset.pattern.permute.xlu0 7
        %593 = vperm.xlu0 %592, %v484
        %v594 = vpop.permute.xlu0 %593
        %596 = vset.pattern.permute.xlu0 7
        %597 = vperm.xlu0 %596, %v485
        %v598 = vpop.permute.xlu0 %597
        %v600 = vlaneseq
        %v601 = vshrl.u32 %v600, 7
        %v602 = vsub.s32 3, %v601
        %v603 = vrot.slane %v482, %v602
        %v604 = vmul.f32 %v594, %v603
        %v605 = vmul.f32 %v598, %v603
        %v606 = vadd.f32 %v590, %v604
        %v607 = vadd.f32 %v591, %v605
        %608 = vset.pattern.permute.xlu0 8
        %609 = vperm.xlu0 %608, %v484
        %v610 = vpop.permute.xlu0 %609
        %612 = vset.pattern.permute.xlu0 8
        %613 = vperm.xlu0 %612, %v485
        %v614 = vpop.permute.xlu0 %613
        %v616 = vlaneseq
        %v617 = vshrl.u32 %v616, 7
        %v618 = vsub.s32 4, %v617
        %v619 = vrot.slane %v482, %v618
        %v620 = vmul.f32 %v610, %v619
        %v621 = vmul.f32 %v614, %v619
        %v622 = vadd.f32 %v606, %v620
        %v623 = vadd.f32 %v607, %v621
        %624 = vset.pattern.permute.xlu0 9
        %625 = vperm.xlu0 %624, %v484
        %v626 = vpop.permute.xlu0 %625
        %628 = vset.pattern.permute.xlu0 9
        %629 = vperm.xlu0 %628, %v485
        %v630 = vpop.permute.xlu0 %629
        %v632 = vlaneseq
        %v633 = vshrl.u32 %v632, 7
        %v634 = vsub.s32 5, %v633
        %v635 = vrot.slane %v482, %v634
        %v636 = vmul.f32 %v626, %v635
        %v637 = vmul.f32 %v630, %v635
        %v638 = vadd.f32 %v622, %v636
        %v639 = vadd.f32 %v623, %v637
        %640 = vset.pattern.permute.xlu0 10
        %641 = vperm.xlu0 %640, %v484
        %v642 = vpop.permute.xlu0 %641
        %644 = vset.pattern.permute.xlu0 10
        %645 = vperm.xlu0 %644, %v485
        %v646 = vpop.permute.xlu0 %645
        %v648 = vlaneseq
        %v649 = vshrl.u32 %v648, 7
        %v650 = vsub.s32 6, %v649
        %v651 = vrot.slane %v482, %v650
        %v652 = vmul.f32 %v642, %v651
        %v653 = vmul.f32 %v646, %v651
        %v654 = vadd.f32 %v638, %v652
        %v655 = vadd.f32 %v639, %v653
        %656 = vset.pattern.permute.xlu0 11
        %657 = vperm.xlu0 %656, %v484
        %v658 = vpop.permute.xlu0 %657
        %660 = vset.pattern.permute.xlu0 11
        %661 = vperm.xlu0 %660, %v485
        %v662 = vpop.permute.xlu0 %661
        %v664 = vlaneseq
        %v665 = vshrl.u32 %v664, 7
        %v666 = vsub.s32 7, %v665
        %v667 = vrot.slane %v482, %v666
        %v668 = vmul.f32 %v658, %v667
        %v669 = vmul.f32 %v662, %v667
        %v670 = vadd.f32 %v654, %v668
        %v671 = vadd.f32 %v655, %v669
        %672 = vset.pattern.permute.xlu0 12
        %673 = vperm.xlu0 %672, %v484
        %v674 = vpop.permute.xlu0 %673
        %676 = vset.pattern.permute.xlu0 12
        %677 = vperm.xlu0 %676, %v485
        %v678 = vpop.permute.xlu0 %677
        %v680 = vlaneseq
        %v681 = vshrl.u32 %v680, 7
        %v682 = vsub.s32 0, %v681
        %v683 = vrot.slane %v483, %v682
        %v684 = vmul.f32 %v674, %v683
        %v685 = vmul.f32 %v678, %v683
        %v686 = vadd.f32 %v670, %v684
        %v687 = vadd.f32 %v671, %v685
        %688 = vset.pattern.permute.xlu0 13
        %689 = vperm.xlu0 %688, %v484
        %v690 = vpop.permute.xlu0 %689
        %692 = vset.pattern.permute.xlu0 13
        %693 = vperm.xlu0 %692, %v485
        %v694 = vpop.permute.xlu0 %693
        %v696 = vlaneseq
        %v697 = vshrl.u32 %v696, 7
        %v698 = vsub.s32 1, %v697
        %v699 = vrot.slane %v483, %v698
        %v700 = vmul.f32 %v690, %v699
        %v701 = vmul.f32 %v694, %v699
        %v702 = vadd.f32 %v686, %v700
        %v703 = vadd.f32 %v687, %v701
        %704 = vset.pattern.permute.xlu0 14
        %705 = vperm.xlu0 %704, %v484
        %v706 = vpop.permute.xlu0 %705
        %708 = vset.pattern.permute.xlu0 14
        %709 = vperm.xlu0 %708, %v485
        %v710 = vpop.permute.xlu0 %709
        %v712 = vlaneseq
        %v713 = vshrl.u32 %v712, 7
        %v714 = vsub.s32 2, %v713
        %v715 = vrot.slane %v483, %v714
        %v716 = vmul.f32 %v706, %v715
        %v717 = vmul.f32 %v710, %v715
        %v718 = vadd.f32 %v702, %v716
        %v719 = vadd.f32 %v703, %v717
        %720 = vset.pattern.permute.xlu0 15
        %721 = vperm.xlu0 %720, %v484
        %v722 = vpop.permute.xlu0 %721
        %724 = vset.pattern.permute.xlu0 15
        %725 = vperm.xlu0 %724, %v485
        %v726 = vpop.permute.xlu0 %725
        %v728 = vlaneseq
        %v729 = vshrl.u32 %v728, 7
        %v730 = vsub.s32 3, %v729
        %v731 = vrot.slane %v483, %v730
        %v732 = vmul.f32 %v722, %v731
        %v733 = vmul.f32 %v726, %v731
        %v734 = vadd.f32 %v718, %v732
        %v735 = vadd.f32 %v719, %v733
        %736 = vset.pattern.permute.xlu0 16
        %737 = vperm.xlu0 %736, %v484
        %v738 = vpop.permute.xlu0 %737
        %740 = vset.pattern.permute.xlu0 16
        %741 = vperm.xlu0 %740, %v485
        %v742 = vpop.permute.xlu0 %741
        %v744 = vlaneseq
        %v745 = vshrl.u32 %v744, 7
        %v746 = vsub.s32 4, %v745
        %v747 = vrot.slane %v483, %v746
        %v748 = vmul.f32 %v738, %v747
        %v749 = vmul.f32 %v742, %v747
        %v750 = vadd.f32 %v734, %v748
        %v751 = vadd.f32 %v735, %v749
        %752 = vset.pattern.permute.xlu0 17
        %753 = vperm.xlu0 %752, %v484
        %v754 = vpop.permute.xlu0 %753
        %756 = vset.pattern.permute.xlu0 17
        %757 = vperm.xlu0 %756, %v485
        %v758 = vpop.permute.xlu0 %757
        %v760 = vlaneseq
        %v761 = vshrl.u32 %v760, 7
        %v762 = vsub.s32 5, %v761
        %v763 = vrot.slane %v483, %v762
        %v764 = vmul.f32 %v754, %v763
        %v765 = vmul.f32 %v758, %v763
        %v766 = vadd.f32 %v750, %v764
        %v767 = vadd.f32 %v751, %v765
        %768 = vset.pattern.permute.xlu0 18
        %769 = vperm.xlu0 %768, %v484
        %v770 = vpop.permute.xlu0 %769
        %772 = vset.pattern.permute.xlu0 18
        %773 = vperm.xlu0 %772, %v485
        %v774 = vpop.permute.xlu0 %773
        %v776 = vlaneseq
        %v777 = vshrl.u32 %v776, 7
        %v778 = vsub.s32 6, %v777
        %v779 = vrot.slane %v483, %v778
        %v780 = vmul.f32 %v770, %v779
        %v781 = vmul.f32 %v774, %v779
        %v782 = vadd.f32 %v766, %v780
        %v783 = vadd.f32 %v767, %v781
        %784 = vset.pattern.permute.xlu0 19
        %785 = vperm.xlu0 %784, %v484
        %v786 = vpop.permute.xlu0 %785
        %788 = vset.pattern.permute.xlu0 19
        %789 = vperm.xlu0 %788, %v485
        %v790 = vpop.permute.xlu0 %789
        %v792 = vlaneseq
        %v793 = vshrl.u32 %v792, 7
        %v794 = vsub.s32 7, %v793
        %v795 = vrot.slane %v483, %v794
        %v796 = vmul.f32 %v786, %v795
        %v797 = vmul.f32 %v790, %v795
        %v798 = vadd.f32 %v782, %v796
        %v799 = vadd.f32 %v783, %v797
        %800 = vst [vmem:[%s130] sm:$0xff] %v798
        %801 = vst [vmem:[%s130 + $0x8] sm:$0x3f] %v799
        %s802 = sand.u32 %s68, 1
        %s803 = sand.u32 %s68, 1
        %s804 = smul.addr %s803, 16
        %s805 = scalar_lea.vmem [#allocation2], %s804
        // Predicated region
        $region29: #{supernet_forward.1} parent=27 // pred_check
          %p806 = pneg %p78
        $region30: #{supernet_forward.1} parent=27 // pred_check_branch
          %808 = sbr.rel (%p806) target = $region32
        $region31: #{supernet_forward.1} parent=27 // pred_region
          %s809 = smul.addr %s13, 8
          %s810 = scalar_lea.vmem %s2, %s809
          // Predicated region
          $region33: #{supernet_forward.1} parent=31 // pred_check
            _
          $region34: #{supernet_forward.1} parent=31 // pred_check_branch
            %812 = sbr.rel (0) target = $region36
          $region35: #{supernet_forward.1} parent=31 // pred_region
            // Predicated region
            $region37: #{supernet_forward.1} parent=35 // pred_check
              _
            $region38: #{supernet_forward.1} parent=35 // pred_check_branch
              %814 = sbr.rel (0) target = $region40
            $region39: #{supernet_forward.1} parent=35 // pred_region
              // Predicated region
              $region52: #{supernet_forward.1} parent=39 // pred_check
                _
              $region53: #{supernet_forward.1} parent=39 // pred_check_branch
                %831 = sbr.rel (0) target = $region55
              $region54: #{supernet_forward.1} parent=39 // pred_region
                loop: start=0, step=1, limit=1
                $region56: #{supernet_forward.1} parent=54 // loop_pre_header
                  _
                $region57: #{supernet_forward.1} parent=54 // loop_header
                  %s833 = sphi 0, %s837
                  %p834 = scmp.ge.s32.totalorder %s833, 1
                  %s838 = sphi %s805, %s805
                  %s839 = sphi %s810, %s810
                $region58: #{supernet_forward.1} parent=54 // loop_header_branch
                  %836 = sbr.rel (%p834) target = $region62
                $region59: #{supernet_forward.1} parent=54 // loop_body
                  %v840 = vld [vmem:[%s838] sm:$0xff]
                  %841 = vst [vmem:[%s839] sm:$0xff] %v840
                  %v842 = vld [vmem:[%s838 + $0x8] sm:$0xff]
                  %843 = vst [vmem:[%s839 + $0x10] sm:$0xff] %v842
                $region60: #{supernet_forward.1} parent=54 // loop_footer
                  %s837 = sadd.s32 1, %s833
                $region61: #{supernet_forward.1} parent=54 // loop_footer_branch
                  %832 = sbr.rel target = $region57
                $region62: #{supernet_forward.1} parent=54 // loop_exit
                  _
              $region55: #{supernet_forward.1} parent=39 // pred_fallthru
                _
              // Predicated region
              $region63: #{supernet_forward.1} parent=39 // pred_check
                _
              $region64: #{supernet_forward.1} parent=39 // pred_check_branch
                %845 = sbr.rel target = $region66
              $region65: #{supernet_forward.1} parent=39 // pred_region
                _
              $region66: #{supernet_forward.1} parent=39 // pred_fallthru
                _
            $region40: #{supernet_forward.1} parent=35 // pred_fallthru
              _
            // Predicated region
            $region41: #{supernet_forward.1} parent=35 // pred_check
              _
            $region42: #{supernet_forward.1} parent=35 // pred_check_branch
              %816 = sbr.rel target = $region44
            $region43: #{supernet_forward.1} parent=35 // pred_region
              loop: start=0, step=1, limit=1
              $region45: #{supernet_forward.1} parent=43 // loop_pre_header
                _
              $region46: #{supernet_forward.1} parent=43 // loop_header
                %s819 = sphi 0, %s823
                %p820 = scmp.ge.s32.totalorder %s819, 1
                %s824 = sphi %s805, %s805
                %s825 = sphi %s810, %s810
              $region47: #{supernet_forward.1} parent=43 // loop_header_branch
                %822 = sbr.rel (%p820) target = $region51
              $region48: #{supernet_forward.1} parent=43 // loop_body
                %v826 = vld [vmem:[%s824] sm:$0xff]
                %827 = vst [vmem:[%s825] sm:$0xff] %v826
                %v828 = vld [vmem:[%s824 + $0x8] sm:$0xff]
                %829 = vst [vmem:[%s825 + $0x10] sm:$0xff] %v828
              $region49: #{supernet_forward.1} parent=43 // loop_footer
                %s823 = sadd.s32 1, %s819
              $region50: #{supernet_forward.1} parent=43 // loop_footer_branch
                %818 = sbr.rel target = $region46
              $region51: #{supernet_forward.1} parent=43 // loop_exit
                _
            $region44: #{supernet_forward.1} parent=35 // pred_fallthru
              _
          $region36: #{supernet_forward.1} parent=31 // pred_fallthru
            _
          %846 = vnop
        $region32: #{supernet_forward.1} parent=27 // pred_fallthru
          _
      $region28: #{supernet_forward.1} parent=5 // pred_fallthru
        _
      %p847 = scmp.le.s32.totalorder 2, %s8
      // Predicated region
      $region67: #{supernet_forward.1} parent=5 // pred_check
        %p848 = pneg %p847
      $region68: #{supernet_forward.1} parent=5 // pred_check_branch
        %850 = sbr.rel (%p848) target = $region70
      $region69: #{supernet_forward.1} parent=5 // pred_region
        %s851 = ssub.s32 %s8, 2
        // Predicated region
        $region71: #{supernet_forward.1} parent=69 // pred_check
          %p852 = pneg %p84
        $region72: #{supernet_forward.1} parent=69 // pred_check_branch
          %854 = sbr.rel (%p852) target = $region74
        $region73: #{supernet_forward.1} parent=69 // pred_region
          %s855 = sand.u32 %s69, 1
          %s856 = sand.u32 %s69, 1
          %s857 = smul.addr %s856, 16
          %s858 = scalar_lea.vmem [#allocation2], %s857
        $region74: #{supernet_forward.1} parent=69 // pred_fallthru
          _
      $region70: #{supernet_forward.1} parent=5 // pred_fallthru
        _
    $region6: #{supernet_forward.1} parent=1 // loop_footer
      %s12 = sadd.s32 1, %s8
    $region7: #{supernet_forward.1} parent=1 // loop_footer_branch
      %7 = sbr.rel target = $region3
    $region8: #{supernet_forward.1} parent=1 // loop_exit
      _

</llo_original>
